<compile_context>
chip_gen: v7x
topology: tpu7x:2x2x1
jax: 0.10.0
libtpu: 0.0.40
codegen_flags: <defaults>
</compile_context>

<pallas_src>
import functools

import jax
import jax.numpy as jnp
from jax.experimental import pallas as pl
from jax.experimental.pallas import tpu as pltpu

_TARGET_BLOCK_BYTES = 8 * 1024 * 1024  # ~8 MiB input block, double-buffered ~16 MiB


def _channel_attention_kernel(x_ref, w1_ref, w2_ref, out_ref, acc_ref, *,
                              hw_total, hw_tile, n_tile, needs_mask):
    # x_ref  : (n_tile, C, hw_tile)  input dtype
    # w1_ref : (C, Cr)    w2_ref : (Cr, C)
    # out_ref: (n_tile, 1, C)
    # acc_ref: (2*n_tile, C) f32 scratch; rows [0:n_tile]=running max,
    #          rows [n_tile:2*n_tile]=running sum.
    hw_idx = pl.program_id(1)
    c = x_ref.shape[1]

    @pl.when(hw_idx == 0)
    def _init():
        row = jax.lax.broadcasted_iota(jnp.int32, (2 * n_tile, c), 0)
        acc_ref[...] = jnp.where(row < n_tile, -jnp.inf, 0.0).astype(jnp.float32)

    def _accumulate(x_for_max, x_for_sum):
        # Reduce in the loaded dtype over lanes; accumulate in f32.
        tile_max = jnp.max(x_for_max, axis=-1).astype(jnp.float32)   # (n_tile, C)
        tile_sum = jnp.sum(x_for_sum, axis=-1, dtype=jnp.float32)    # (n_tile, C)
        acc_ref[pl.ds(0, n_tile), :] = jnp.maximum(
            acc_ref[pl.ds(0, n_tile), :], tile_max)
        acc_ref[pl.ds(n_tile, n_tile), :] = (
            acc_ref[pl.ds(n_tile, n_tile), :] + tile_sum)

    if needs_mask:
        # Only the final spatial block is partial: keep the per-element mask
        # work off the hot path (runs once, not every step).
        last = pl.num_programs(1) - 1

        @pl.when(hw_idx < last)
        def _full_step():
            x = x_ref[...]
            _accumulate(x, x)

        @pl.when(hw_idx == last)
        def _tail_step():
            x = x_ref[...]
            lane = jax.lax.broadcasted_iota(jnp.int32, (1, 1, hw_tile), 2)
            valid = (hw_idx * hw_tile + lane) < hw_total
            _accumulate(
                jnp.where(valid, x, jnp.asarray(-jnp.inf, dtype=x.dtype)),
                jnp.where(valid, x, jnp.asarray(0, dtype=x.dtype)))
    else:
        x = x_ref[...]
        _accumulate(x, x)

    @pl.when(hw_idx == pl.num_programs(1) - 1)
    def _finalize():
        # Turn the running sum into the mean with a single 1/HW multiply.
        row = jax.lax.broadcasted_iota(jnp.int32, (2 * n_tile, c), 0)
        scale = jnp.where(row < n_tile, 1.0, 1.0 / hw_total).astype(jnp.float32)
        pooled = acc_ref[...] * scale                  # (2*n_tile, C) = [max ; avg]

        w1 = w1_ref[...]                               # (C, Cr)
        w2 = w2_ref[...]                               # (Cr, C)
        if w1.dtype != jnp.float32:
            w1 = w1.astype(jnp.float32)
        if w2.dtype != jnp.float32:
            w2 = w2.astype(jnp.float32)
        h = jnp.dot(pooled, w1, preferred_element_type=jnp.float32)
        h = jnp.maximum(h, 0.0)                        # ReLU
        y = jnp.dot(h, w2, preferred_element_type=jnp.float32)   # (2*n_tile, C)

        out = jax.nn.sigmoid(y[:n_tile] + y[n_tile:])            # (n_tile, C)
        out_ref[...] = out.reshape(n_tile, 1, c).astype(out_ref.dtype)


def _pick_hw_tile(hw, c, itemsize, target_bytes):
    """Full HW if one (1, C, HW) slab fits the budget (contiguous, unmasked);
    otherwise the largest 128-aligned slice that does."""
    row_bytes = c * itemsize
    if hw <= 128 or hw * row_bytes <= target_bytes:
        return hw                               # full extent: 1 step, no mask
    lanes = max(128, target_bytes // row_bytes)
    return max(128, min((lanes // 128) * 128, (hw // 128) * 128))


def _pick_n_tile(n, c, hw_tile, itemsize, target_bytes):
    """Largest divisor of n that (a) keeps the block within the byte budget and
    (b) leaves the parallel grid axis with length >= 2 when n >= 2 (v7x)."""
    block_bytes = max(1, c * hw_tile * itemsize)
    budget_rows = max(1, target_bytes // block_bytes)
    cap = n if n < 2 else n // 2
    best = 1
    for d in range(1, n + 1):
        if n % d == 0 and d <= budget_rows and d <= cap:
            best = d
    return best


def channel_attention(f_nchw, w1, w2, *, target_block_bytes=_TARGET_BLOCK_BYTES):
    """CBAM channel attention.

    f_nchw: (N, C, H, W); w1: (C//r, C) nn.Linear weight; w2: (C, C//r).
    Returns sigmoid(MLP(maxpool) + MLP(avgpool)) with shape (N, C, 1, 1).
    """
    n, c, h, w = f_nchw.shape
    assert jnp.issubdtype(f_nchw.dtype, jnp.floating), (
        "channel_attention requires a floating-point input (-inf masking/init)")
    hw = h * w
    x = f_nchw.reshape(n, c, hw)             # glue: flatten spatial dims
    w1t = w1.T                               # (C, Cr)
    w2t = w2.T                               # (Cr, C)
    cr = w1t.shape[1]

    itemsize = x.dtype.itemsize
    hw_tile = _pick_hw_tile(hw, c, itemsize, target_block_bytes)
    n_tile = _pick_n_tile(n, c, hw_tile, itemsize, target_block_bytes)
    hw_steps = pl.cdiv(hw, hw_tile)
    needs_mask = (hw % hw_tile) != 0

    kernel = functools.partial(
        _channel_attention_kernel,
        hw_total=hw, hw_tile=hw_tile, n_tile=n_tile, needs_mask=needs_mask)

    cost = pl.CostEstimate(
        flops=2 * n * c * hw + 8 * n * c * cr,
        transcendentals=n * c,
        bytes_accessed=n * c * hw * itemsize
        + 2 * c * cr * w1t.dtype.itemsize
        + n * c * itemsize,
    )

    out_n1c = pl.pallas_call(
        kernel,
        out_shape=jax.ShapeDtypeStruct((n, 1, c), f_nchw.dtype),
        grid_spec=pltpu.PrefetchScalarGridSpec(
            num_scalar_prefetch=0,
            grid=(n // n_tile, hw_steps),
            in_specs=[
                pl.BlockSpec((n_tile, c, hw_tile), lambda i, j: (i, 0, j)),
                pl.BlockSpec((c, cr), lambda i, j: (0, 0)),   # weights stay resident
                pl.BlockSpec((cr, c), lambda i, j: (0, 0)),
            ],
            out_specs=pl.BlockSpec((n_tile, 1, c), lambda i, j: (i, 0, 0)),
            scratch_shapes=[pltpu.VMEM((2 * n_tile, c), jnp.float32)],
        ),
        compiler_params=pltpu.CompilerParams(
            dimension_semantics=("parallel", "arbitrary"),
            vmem_limit_bytes=32 * 1024 * 1024,
        ),
        cost_estimate=cost,
    )(x, w1t, w2t)

    return out_n1c.reshape(n, c, 1, 1)


if __name__ == "__main__":
    def reference(f, w1, w2):
        n_, c_ = f.shape[0], f.shape[1]
        flat = f.reshape(n_, c_, -1)
        f_max = jnp.max(flat, axis=-1)
        f_avg = jnp.mean(flat, axis=-1)
        mlp = lambda v: jnp.maximum(v @ w1.T, 0.0) @ w2.T
        return jax.nn.sigmoid(mlp(f_max) + mlp(f_avg)).reshape(n_, c_, 1, 1)

    N, C, H, W = 2, 16, 16, 16
    reduction = 8
    Cr = C // reduction

    key = jax.random.PRNGKey(0)
    k_x, k_w1, k_w2, k_x2, k_x3 = jax.random.split(key, 5)

    f = jax.random.normal(k_x, (N, C, H, W), dtype=jnp.float32)
    # nn.Linear weights (out, in), no bias.
    w1 = jax.random.normal(k_w1, (Cr, C), dtype=jnp.float32) * 0.1   # Linear(C -> C//r)
    w2 = jax.random.normal(k_w2, (C, Cr), dtype=jnp.float32) * 0.1   # Linear(C//r -> C)

    # 1) Common case: full-HW contiguous block, single unmasked reduction step.
    out = channel_attention(f, w1, w2)
    jax.block_until_ready(out)
    assert out.shape == (N, C, 1, 1)
    assert jnp.allclose(out, reference(f, w1, w2), atol=1e-5, rtol=1e-5)

    # 2) Multi-step masked path (HW=130; tiny budget forces hw_tile=128 + tail mask).
    f2 = jax.random.normal(k_x2, (N, C, 10, 13), dtype=jnp.float32)
    out2 = channel_attention(f2, w1, w2, target_block_bytes=8 * 1024)
    jax.block_until_ready(out2)
    assert jnp.allclose(out2, reference(f2, w1, w2), atol=1e-5, rtol=1e-5)

    # 3) n_tile > 1 path (N=4 -> n_tile=2 while keeping the parallel axis >= 2).
    f3 = jax.random.normal(k_x3, (4, C, H, W), dtype=jnp.float32)
    out3 = channel_attention(f3, w1, w2)
    jax.block_until_ready(out3)
    assert jnp.allclose(out3, reference(f3, w1, w2), atol=1e-5, rtol=1e-5)

    print("KERNEL_OK")
</pallas_src>

<mosaic_0001>
module attributes {stable_mosaic.version = 11 : i64} {
  func.func @_channel_attention_kernel(%arg0: i32, %arg1: i32, %arg2: memref<1x16x256xf32, #tpu.memory_space<vmem>>, %arg3: memref<16x2xf32, #tpu.memory_space<vmem>>, %arg4: memref<2x16xf32, #tpu.memory_space<vmem>>, %arg5: memref<1x1x16xf32, #tpu.memory_space<vmem>>, %arg6: memref<2x16xf32, #tpu.memory_space<vmem>>) attributes {dimension_semantics = [#tpu.dimension_semantics<parallel>, #tpu.dimension_semantics<arbitrary>], iteration_bounds = array<i64: 2, 1>, scalar_prefetch = 0 : i64, scratch_operands = 1 : i64, tpu.core_type = #tpu.core_type<tc>, window_params = [{transform_indices = @transform_0, window_bounds = array<i64: 1, 16, 256>}, {pipeline_mode = #tpu.pipeline_mode<synchronous>, transform_indices = @transform_1, window_bounds = array<i64: 16, 2>}, {pipeline_mode = #tpu.pipeline_mode<synchronous>, transform_indices = @transform_2, window_bounds = array<i64: 2, 16>}, {transform_indices = @transform_3, window_bounds = array<i64: 1, 1, 16>}]} {
    %c0_i32 = arith.constant 0 : i32
    %0 = arith.cmpi eq, %arg1, %c0_i32 : i32
    %1 = arith.extui %0 : i1 to i32
    %c0_i32_0 = arith.constant 0 : i32
    %2 = arith.cmpi ne, %1, %c0_i32_0 : i32
    scf.if %2 {
      %15 = tpu.iota {dimensions = array<i32: 0>} : vector<2x16xi32>
      %c1_i32 = arith.constant 1 : i32
      %16 = vector.broadcast %c1_i32 : i32 to vector<2x16xi32>
      %17 = arith.cmpi slt, %15, %16 : vector<2x16xi32>
      %cst_13 = arith.constant 0xFF800000 : f32
      %cst_14 = arith.constant 0.000000e+00 : f32
      %18 = vector.broadcast %cst_13 : f32 to vector<2x16xf32>
      %19 = vector.broadcast %cst_14 : f32 to vector<2x16xf32>
      %20 = arith.select %17, %18, %19 : vector<2x16xi1>, vector<2x16xf32>
      %c0_15 = arith.constant 0 : index
      %c0_16 = arith.constant 0 : index
      %21 = vector.load %arg6[%c0_15, %c0_16] : memref<2x16xf32, #tpu.memory_space<vmem>>, vector<2x16xf32>
      tpu.vector_store %arg6[%c0_15, %c0_16], %20 {strides = array<i32>} : memref<2x16xf32, #tpu.memory_space<vmem>>, vector<2x16xf32>,
    } else {
    }
    %c0 = arith.constant 0 : index
    %c0_1 = arith.constant 0 : index
    %c0_2 = arith.constant 0 : index
    %3 = vector.load %arg2[%c0, %c0_1, %c0_2] : memref<1x16x256xf32, #tpu.memory_space<vmem>>, vector<1x16x256xf32>
    %cst = arith.constant dense<0xFF800000> : vector<1x16xf32>
    %4 = vector.multi_reduction <maximumf>, %3, %cst [2] : vector<1x16x256xf32> to vector<1x16xf32>
    %cst_3 = arith.constant dense<0.000000e+00> : vector<1x16xf32>
    %5 = vector.multi_reduction <add>, %3, %cst_3 [2] : vector<1x16x256xf32> to vector<1x16xf32>
    %c0_4 = arith.constant 0 : index
    %c0_5 = arith.constant 0 : index
    %6 = vector.load %arg6[%c0_4, %c0_5] : memref<2x16xf32, #tpu.memory_space<vmem>>, vector<1x16xf32>
    %7 = arith.maximumf %6, %4 : vector<1x16xf32>
    %c0_6 = arith.constant 0 : index
    %c0_7 = arith.constant 0 : index
    %8 = vector.load %arg6[%c0_6, %c0_7] : memref<2x16xf32, #tpu.memory_space<vmem>>, vector<1x16xf32>
    tpu.vector_store %arg6[%c0_6, %c0_7], %7 {strides = array<i32>} : memref<2x16xf32, #tpu.memory_space<vmem>>, vector<1x16xf32>,
    %c1 = arith.constant 1 : index
    %c0_8 = arith.constant 0 : index
    %9 = vector.load %arg6[%c1, %c0_8] : memref<2x16xf32, #tpu.memory_space<vmem>>, vector<1x16xf32>
    %10 = arith.addf %9, %5 : vector<1x16xf32>
    %c1_9 = arith.constant 1 : index
    %c0_10 = arith.constant 0 : index
    %11 = vector.load %arg6[%c1_9, %c0_10] : memref<2x16xf32, #tpu.memory_space<vmem>>, vector<1x16xf32>
    tpu.vector_store %arg6[%c1_9, %c0_10], %10 {strides = array<i32>} : memref<2x16xf32, #tpu.memory_space<vmem>>, vector<1x16xf32>,
    %c0_i32_11 = arith.constant 0 : i32
    %12 = arith.cmpi eq, %arg1, %c0_i32_11 : i32
    %13 = arith.extui %12 : i1 to i32
    %c0_i32_12 = arith.constant 0 : i32
    %14 = arith.cmpi ne, %13, %c0_i32_12 : i32
    scf.if %14 {
      %15 = tpu.iota {dimensions = array<i32: 0>} : vector<2x16xi32>
      %c1_i32 = arith.constant 1 : i32
      %16 = vector.broadcast %c1_i32 : i32 to vector<2x16xi32>
      %17 = arith.cmpi slt, %15, %16 : vector<2x16xi32>
      %cst_13 = arith.constant 1.000000e+00 : f32
      %cst_14 = arith.constant 3.906250e-03 : f32
      %18 = vector.broadcast %cst_13 : f32 to vector<2x16xf32>
      %19 = vector.broadcast %cst_14 : f32 to vector<2x16xf32>
      %20 = arith.select %17, %18, %19 : vector<2x16xi1>, vector<2x16xf32>
      %c0_15 = arith.constant 0 : index
      %c0_16 = arith.constant 0 : index
      %21 = vector.load %arg6[%c0_15, %c0_16] : memref<2x16xf32, #tpu.memory_space<vmem>>, vector<2x16xf32>
      %22 = arith.mulf %21, %20 : vector<2x16xf32>
      %c0_17 = arith.constant 0 : index
      %c0_18 = arith.constant 0 : index
      %23 = vector.load %arg3[%c0_17, %c0_18] : memref<16x2xf32, #tpu.memory_space<vmem>>, vector<16x2xf32>
      %c0_19 = arith.constant 0 : index
      %c0_20 = arith.constant 0 : index
      %24 = vector.load %arg4[%c0_19, %c0_20] : memref<2x16xf32, #tpu.memory_space<vmem>>, vector<2x16xf32>
      %cst_21 = arith.constant dense<0.000000e+00> : vector<2x2xf32>
      %25 = tpu.matmul %22, %23, %cst_21 {dimension_numbers = #tpu.dot_dimension_numbers<[1], [0], [0], [1], [0, 0, 1, 1], [], []>} : vector<2x16xf32>, vector<16x2xf32>, vector<2x2xf32> -> vector<2x2xf32>
      %cst_22 = arith.constant 0.000000e+00 : f32
      %26 = vector.broadcast %cst_22 : f32 to vector<2x2xf32>
      %27 = arith.maximumf %25, %26 : vector<2x2xf32>
      %cst_23 = arith.constant dense<0.000000e+00> : vector<2x16xf32>
      %28 = tpu.matmul %27, %24, %cst_23 {dimension_numbers = #tpu.dot_dimension_numbers<[1], [0], [0], [1], [0, 0, 1, 1], [], []>} : vector<2x2xf32>, vector<2x16xf32>, vector<2x16xf32> -> vector<2x16xf32>
      %29 = vector.extract_strided_slice %28 {offsets = [0, 0], sizes = [1, 16], strides = [1, 1]} : vector<2x16xf32> to vector<1x16xf32>
      %30 = vector.extract_strided_slice %28 {offsets = [1, 0], sizes = [1, 16], strides = [1, 1]} : vector<2x16xf32> to vector<1x16xf32>
      %31 = arith.addf %29, %30 : vector<1x16xf32>
      %32 = arith.negf %31 : vector<1x16xf32>
      %33 = math.exp %32 : vector<1x16xf32>
      %cst_24 = arith.constant 1.000000e+00 : f32
      %34 = vector.broadcast %cst_24 : f32 to vector<1x16xf32>
      %35 = arith.addf %34, %33 : vector<1x16xf32>
      %36 = arith.divf %34, %35 : vector<1x16xf32>
      %37 = vector.shape_cast %36 : vector<1x16xf32> to vector<1x1x16xf32>
      %c0_25 = arith.constant 0 : index
      %c0_26 = arith.constant 0 : index
      %c0_27 = arith.constant 0 : index
      %38 = vector.load %arg5[%c0_25, %c0_26, %c0_27] : memref<1x1x16xf32, #tpu.memory_space<vmem>>, vector<1x1x16xf32>
      tpu.vector_store %arg5[%c0_25, %c0_26, %c0_27], %37 {strides = array<i32>} : memref<1x1x16xf32, #tpu.memory_space<vmem>>, vector<1x1x16xf32>,
    } else {
    }
    return
  }
  func.func @transform_0(%arg0: i32, %arg1: i32) -> (i32, i32, i32) {
    %c0_i32 = arith.constant 0 : i32
    %c0_i32_0 = arith.constant 0 : i32
    return %arg0, %c0_i32, %arg1 : i32, i32, i32
  }
  func.func @transform_1(%arg0: i32, %arg1: i32) -> (i32, i32) {
    %c0_i32 = arith.constant 0 : i32
    %c0_i32_0 = arith.constant 0 : i32
    %c0_i32_1 = arith.constant 0 : i32
    return %c0_i32, %c0_i32_0 : i32, i32
  }
  func.func @transform_2(%arg0: i32, %arg1: i32) -> (i32, i32) {
    %c0_i32 = arith.constant 0 : i32
    %c0_i32_0 = arith.constant 0 : i32
    %c0_i32_1 = arith.constant 0 : i32
    return %c0_i32, %c0_i32_0 : i32, i32
  }
  func.func @transform_3(%arg0: i32, %arg1: i32) -> (i32, i32, i32) {
    %c0_i32 = arith.constant 0 : i32
    %c0_i32_0 = arith.constant 0 : i32
    %c0_i32_1 = arith.constant 0 : i32
    return %arg0, %c0_i32, %c0_i32_0 : i32, i32, i32
  }
}

</mosaic_0001>

<llo_original>
// kernel: tpu_custom_call.1
$region0: #{tpu_custom_call.1}
  #allocation0 [shape = 'u32[]', space=smem, size = 0x4, offset = 0x4, fixed_abs, tag = 'smem constant byte address 0x4 - core index']
  #allocation1 [shape = 'u32[144,128]{1,0:T(1,128)}', space=vmem, size = 0x12000, scoped, tag = 'internal scratch']
  #allocation2 [shape = 'f32[2,16]{1,0:T(2,128)}', space=vmem, size = 0x400, scoped, tag = 'scratch operand']
  %s0 = inlined_call_operand.hbm [shape: f32[2,16,256], index: 0, kind: input, shape index: {}]
  %s1 = inlined_call_operand.vmem [shape: f32[16,2], index: 1, kind: input, shape index: {}]
  %s2 = inlined_call_operand.vmem [shape: f32[2,16], index: 2, kind: input, shape index: {}]
  %s3 = inlined_call_operand.hbm [shape: f32[2,1,16], index: 3, kind: output, shape index: {}]
  %s4 = sld [smem:[#allocation0]]
  $region57: #{tpu_custom_call.1} parent=0
    _
  %s6 = ssub.s32 1, %s4
  %s7 = scalar_select 0, %s6, %s4
  $region1: #{tpu_custom_call.1} parent=0
    #allocation3 [shape = 'u8[32768]{0}', space=vmem, size = 0x8000, scoped, tag = 'input window, operand 0']
    #allocation4 [shape = 's32[2]{0}', space=sflag, size = 0x8, scoped, tag = 'scoped memory for tpu_custom_call.1']
    #allocation5 [shape = 's32[2]{0}', space=sflag, size = 0x8, scoped, tag = 'scoped memory for tpu_custom_call.1']
    #allocation6 [shape = 'u8[1024]{0}', space=vmem, size = 0x400, scoped, tag = 'output window, operand 0']
    %8 = vsyncpa [#allocation4], 0
    %s9 = scalar_lea.sflag [#allocation4], 1
    %10 = vsyncpa %s9, 0
    %11 = vsyncpa [#allocation5], 0
    %s12 = scalar_lea.sflag [#allocation5], 1
    %13 = vsyncpa %s12, 0
    loop: start=0, step=1, limit=4
    $region2: #{tpu_custom_call.1} parent=1 // loop_pre_header
      _
    $region3: #{tpu_custom_call.1} parent=1 // loop_header
      %s15 = sphi 0, %s19
      %p16 = scmp.ge.s32.totalorder %s15, 4
      %s22 = sphi 0, %s34
      %s23 = sphi 0, %s30
      %s24 = sphi 0, %s22
      %s25 = sphi 0, %s23
      %s26 = sphi 0, %s24
      %s27 = sphi 0, %s25
      %s39 = sphi 0, %s41
      %s42 = sphi 0, %s39
      %s43 = sphi 0, %s42
      %s59 = sphi 0, %s43
      %s63 = sphi 0, %s63
      %s65 = sphi 0, %s63
      %s66 = sphi 0, %s65
      %s80 = sphi 0, %s66
      %s84 = sphi 0, %s84
      %s86 = sphi 0, %s84
      %s87 = sphi 0, %s86
      %s101 = sphi 0, %s87
      %s107 = sphi 0, %s109
      %s110 = sphi 0, %s107
      %s111 = sphi 0, %s110
      %s127 = sphi 0, %s111
    $region4: #{tpu_custom_call.1} parent=1 // loop_header_branch
      %18 = sbr.rel (%p16) target = $region8
    $region5: #{tpu_custom_call.1} parent=1 // loop_body
      %s20 = ssub.s32 %s15, 1
      %s21 = ssub.s32 %s15, 2
      %s28 = sadd.s32 1, %s23
      %p29 = scmp.ge.s32.totalorder %s28, 1
      %s30 = scalar_select %p29, 0, %s28
      %s31 = sadd.s32 1, %s22
      %s32 = scalar_select %p29, %s31, %s22
      %p33 = scmp.ge.s32.totalorder %s32, 2
      %s34 = scalar_select %p33, 0, %s32
      %s35 = ssub.s32 %s22, %s34
      %s36 = ssub.s32 %s23, %s30
      %s37 = sor.u32 %s35, %s36
      %p38 = scmp.eq.s32.totalorder %s37, 0
      %s40 = sadd.s32 %s39, 1
      %s41 = scalar_select %p38, %s39, %s40
      %p44 = pneg %p38
      %p45 = scmp.eq.s32.totalorder %s15, 1
      %p46 = por %p44, %p45
      %p47 = scmp.ne.s32.totalorder %s39, %s42
      %p48 = scmp.eq.s32.totalorder %s15, 0
      %p49 = por %p47, %p48
      %p50 = scmp.ne.s32.totalorder %s39, %s42
      %p51 = scmp.eq.s32.totalorder %s20, 1
      %p52 = por %p50, %p51
      %p53 = scmp.ne.s32.totalorder %s42, %s43
      %p54 = scmp.eq.s32.totalorder %s20, 0
      %p55 = por %p53, %p54
      %p56 = scmp.ne.s32.totalorder %s42, %s43
      %p57 = scmp.eq.s32.totalorder %s21, 1
      %p58 = por %p56, %p57
      %p60 = scmp.ne.s32.totalorder %s43, %s59
      %p61 = scmp.eq.s32.totalorder %s21, 0
      %p62 = por %p60, %p61
      %s64 = sadd.s32 %s63, 1
      %p67 = scmp.eq.s32.totalorder %s15, 1
      %p68 = scmp.ne.s32.totalorder %s63, %s65
      %p69 = scmp.eq.s32.totalorder %s15, 0
      %p70 = por %p68, %p69
      %p71 = scmp.ne.s32.totalorder %s63, %s65
      %p72 = scmp.eq.s32.totalorder %s20, 1
      %p73 = por %p71, %p72
      %p74 = scmp.ne.s32.totalorder %s65, %s66
      %p75 = scmp.eq.s32.totalorder %s20, 0
      %p76 = por %p74, %p75
      %p77 = scmp.ne.s32.totalorder %s65, %s66
      %p78 = scmp.eq.s32.totalorder %s21, 1
      %p79 = por %p77, %p78
      %p81 = scmp.ne.s32.totalorder %s66, %s80
      %p82 = scmp.eq.s32.totalorder %s21, 0
      %p83 = por %p81, %p82
      %s85 = sadd.s32 %s84, 1
      %p88 = scmp.eq.s32.totalorder %s15, 1
      %p89 = scmp.ne.s32.totalorder %s84, %s86
      %p90 = scmp.eq.s32.totalorder %s15, 0
      %p91 = por %p89, %p90
      %p92 = scmp.ne.s32.totalorder %s84, %s86
      %p93 = scmp.eq.s32.totalorder %s20, 1
      %p94 = por %p92, %p93
      %p95 = scmp.ne.s32.totalorder %s86, %s87
      %p96 = scmp.eq.s32.totalorder %s20, 0
      %p97 = por %p95, %p96
      %p98 = scmp.ne.s32.totalorder %s86, %s87
      %p99 = scmp.eq.s32.totalorder %s21, 1
      %p100 = por %p98, %p99
      %p102 = scmp.ne.s32.totalorder %s87, %s101
      %p103 = scmp.eq.s32.totalorder %s21, 0
      %p104 = por %p102, %p103
      %s105 = ssub.s32 %s22, %s34
      %p106 = scmp.eq.s32.totalorder %s105, 0
      %s108 = sadd.s32 %s107, 1
      %s109 = scalar_select %p106, %s107, %s108
      %p112 = pneg %p106
      %p113 = scmp.eq.s32.totalorder %s15, 1
      %p114 = por %p112, %p113
      %p115 = scmp.ne.s32.totalorder %s107, %s110
      %p116 = scmp.eq.s32.totalorder %s15, 0
      %p117 = por %p115, %p116
      %p118 = scmp.ne.s32.totalorder %s107, %s110
      %p119 = scmp.eq.s32.totalorder %s20, 1
      %p120 = por %p118, %p119
      %p121 = scmp.ne.s32.totalorder %s110, %s111
      %p122 = scmp.eq.s32.totalorder %s20, 0
      %p123 = por %p121, %p122
      %p124 = scmp.ne.s32.totalorder %s110, %s111
      %p125 = scmp.eq.s32.totalorder %s21, 1
      %p126 = por %p124, %p125
      %p128 = scmp.ne.s32.totalorder %s111, %s127
      %p129 = scmp.eq.s32.totalorder %s21, 0
      %p130 = por %p128, %p129
      %p131 = scmp.le.s32.totalorder 1, %s15
      %p132 = scmp.lt.s32.totalorder %s15, 3
      %p133 = pnand %p131, %p132
      %p134 = pneg %p133
      // Predicated region
      $region9: #{tpu_custom_call.1} parent=5 // pred_check
        _
      $region10: #{tpu_custom_call.1} parent=5 // pred_check_branch
        %136 = sbr.rel (%p133) target = $region12
      $region11: #{tpu_custom_call.1} parent=5 // pred_region
        %s137 = ssub.s32 %s15, 1
        // Predicated region
        $region13: #{tpu_custom_call.1} parent=11 // pred_check
          %p138 = pneg %p76
        $region14: #{tpu_custom_call.1} parent=11 // pred_check_branch
          %140 = sbr.rel (%p138) target = $region16
        $region15: #{tpu_custom_call.1} parent=11 // pred_region
          _
        $region16: #{tpu_custom_call.1} parent=11 // pred_fallthru
          _
        // Predicated region
        $region17: #{tpu_custom_call.1} parent=11 // pred_check
          %p141 = pneg %p97
        $region18: #{tpu_custom_call.1} parent=11 // pred_check_branch
          %143 = sbr.rel (%p141) target = $region20
        $region19: #{tpu_custom_call.1} parent=11 // pred_region
          _
        $region20: #{tpu_custom_call.1} parent=11 // pred_fallthru
          _
      $region12: #{tpu_custom_call.1} parent=5 // pred_fallthru
        _
      %p144 = scmp.lt.s32.totalorder %s15, 2
      // Predicated region
      $region21: #{tpu_custom_call.1} parent=5 // pred_check
        %p145 = pneg %p144
      $region22: #{tpu_custom_call.1} parent=5 // pred_check_branch
        %147 = sbr.rel (%p145) target = $region24
      $region23: #{tpu_custom_call.1} parent=5 // pred_region
        // Predicated region
        $region25: #{tpu_custom_call.1} parent=23 // pred_check
          %p148 = pneg %p49
        $region26: #{tpu_custom_call.1} parent=23 // pred_check_branch
          %150 = sbr.rel (%p148) target = $region28
        $region27: #{tpu_custom_call.1} parent=23 // pred_region
          %s151 = sand.u32 %s39, 1
          %s152 = scalar_lea.sflag [#allocation4], %s151
          %s153 = sand.u32 %s39, 1
          %s154 = smul.addr %s153, 32
          %s155 = scalar_lea.vmem [#allocation3], %s154
          %s156 = smul.u32 2, %s23
          %s158 = ssub.s32 512, 512
          %159 = vsyncadd %s152, %s158
          %s160 = smul.addr %s22, 4
          %s161 = sadd.s32 %s156, %s160
          %s162 = smul.addr %s161, 128
          %s163 = scalar_lea.hbm %s0, %s162
          %s164 = sshll.u32 %s155, 4
          %s165 = int_to_ptr.vmem [resolvable:$true] %s164
          %170 = dma.hbm_to_vmem [thread:$0]  %s163, 512, %s165, %s152, 256, 256, 16
        $region28: #{tpu_custom_call.1} parent=23 // pred_fallthru
          _
      $region24: #{tpu_custom_call.1} parent=5 // pred_fallthru
        _
      %p171 = scmp.le.s32.totalorder 1, %s15
      %p172 = scmp.lt.s32.totalorder %s15, 3
      %p173 = pnand %p171, %p172
      %p174 = pneg %p173
      // Predicated region
      $region29: #{tpu_custom_call.1} parent=5 // pred_check
        _
      $region30: #{tpu_custom_call.1} parent=5 // pred_check_branch
        %176 = sbr.rel (%p173) target = $region32
      $region31: #{tpu_custom_call.1} parent=5 // pred_region
        %s177 = ssub.s32 %s15, 1
        %s178 = sand.u32 %s42, 1
        %s179 = scalar_lea.sflag [#allocation4], %s178
        %s180 = sand.u32 %s42, 1
        %s181 = smul.addr %s180, 32
        %s182 = scalar_lea.vmem [#allocation3], %s181
        // Predicated region
        $region33: #{tpu_custom_call.1} parent=31 // pred_check
          %p183 = pneg %p55
        $region34: #{tpu_custom_call.1} parent=31 // pred_check_branch
          %185 = sbr.rel (%p183) target = $region36
        $region35: #{tpu_custom_call.1} parent=31 // pred_region
          %186 = dma.done %s179, 512
        $region36: #{tpu_custom_call.1} parent=31 // pred_fallthru
          _
        %s187 = sand.u32 %s42, 1
        %s188 = scalar_lea.sflag [#allocation4], %s187
        %s189 = sand.u32 %s42, 1
        %s190 = smul.addr %s189, 32
        %s191 = scalar_lea.vmem [#allocation3], %s190
        %p192 = pneg %p55
        %p193 = pneg %p52
        %p194 = pneg %p76
        %p195 = pneg %p73
        %p196 = pneg %p97
        %p197 = pneg %p94
        %p198 = pneg %p123
        %p199 = pneg %p120
        %s200 = sand.u32 %s110, 1
        %s201 = scalar_lea.sflag [#allocation5], %s200
        %s202 = sand.u32 %s110, 1
        %s203 = scalar_lea.vmem [#allocation6], %s202
        %s204 = smul.u32 2, %s25
        %p205 = scmp.eq.s32.totalorder %s25, 0
        // Predicated region
        $region37: #{tpu_custom_call.1} parent=31 // pred_check
          %p206 = pneg %p205
        $region38: #{tpu_custom_call.1} parent=31 // pred_check_branch
          %208 = sbr.rel (%p206) target = $region40
        $region39: #{tpu_custom_call.1} parent=31 // pred_region
          %v209 = vlaneseq
          %v210 = vshrl.u32 %v209, 7
          %vm211 = vcmp.lt.s32.totalorder %v210, 1
          %v212 = vsel %vm211, -inf, 0.0
          %vm213 = vcmask 123904
          %214 = vst.msk [vmem:[#allocation2] sm:$0x3] %vm213, %v212
        $region40: #{tpu_custom_call.1} parent=31 // pred_fallthru
          _
        %v215 = vld [vmem:[%s182] sm:$0xff]
        %v216 = vld [vmem:[%s182 + $0x8] sm:$0xff]
        %v217 = vld [vmem:[%s182 + $0x10] sm:$0xff]
        %v218 = vld [vmem:[%s182 + $0x18] sm:$0xff]
        %v219 = vmax.f32 %v215, %v216
        %220 = vmax.xlane.f32.xlu0 %v219
        %v221 = vpop.xlane.xlu0 %220
        %v222 = vmax.f32 %v217, %v218
        %223 = vmax.xlane.f32.xlu0 %v222
        %v224 = vpop.xlane.xlu0 %223
        %v225 = vadd.f32 %v215, %v216
        %226 = vadd.xlane.f32.xlu0 %v225
        %v227 = vpop.xlane.xlu0 %226
        %v228 = vadd.f32 %v217, %v218
        %229 = vadd.xlane.f32.xlu0 %v228
        %v230 = vpop.xlane.xlu0 %229
        %v231 = vld [vmem:[#allocation2] sm:$0x1]
        %v234 = vlaneseq
        %v235 = vand.u32 %v234, 127
        %v236 = vlaneseq
        %v237 = vshrl.u32 %v236, 7
        %v238 = vsub.s32 %v235, %v237
        %v239 = vrot.slane %v221, %v238
        %v240 = vadd.s32 %v235, 4294967288
        %v241 = vlaneseq
        %v242 = vshrl.u32 %v241, 7
        %v243 = vsub.s32 %v240, %v242
        %v244 = vrot.slane %v224, %v243
        %vm245 = vcmask 130112
        %v246 = vsel %vm245, %v244, %v239
        %v248 = vmax.f32 %v231, %v246
        %vm249 = vcmask 122880
        %250 = vst.msk [vmem:[#allocation2] sm:$0x1] %vm249, %v248
        %v251 = vld [vmem:[#allocation2 + $0x1] sm:$0x1]
        %v254 = vlaneseq
        %v255 = vshrl.u32 %v254, 7
        %v256 = vsub.s32 %v235, %v255
        %v257 = vrot.slane %v227, %v256
        %v258 = vlaneseq
        %v259 = vshrl.u32 %v258, 7
        %v260 = vsub.s32 %v240, %v259
        %v261 = vrot.slane %v230, %v260
        %v262 = vsel %vm245, %v261, %v257
        %v264 = vadd.f32 %v251, %v262
        %265 = vst.msk [vmem:[#allocation2 + $0x1] sm:$0x1] %vm249, %v264
        // Predicated region
        $region41: #{tpu_custom_call.1} parent=31 // pred_check
          %p266 = pneg %p205
        $region42: #{tpu_custom_call.1} parent=31 // pred_check_branch
          %268 = sbr.rel (%p266) target = $region44
        $region43: #{tpu_custom_call.1} parent=31 // pred_region
          %v269 = vlaneseq
          %v270 = vshrl.u32 %v269, 7
          %vm271 = vcmp.lt.s32.totalorder %v270, 1
          %v272 = vsel %vm271, 1.0, 0.00390625
          %v273 = vld [vmem:[#allocation2] sm:$0x3]
          %v274 = vmul.f32 %v273, %v272
          %v275 = vld [vmem:[%s1] sm:$0xff]
          %v276 = vld [vmem:[%s1 + $0x8] sm:$0xff]
          %v277 = vld [vmem:[%s2] sm:$0x3]
          %vm278 = vcmask 130048
          %v280 = vsel %vm278, %v274, 0
          %282 = vmatprep.subr.mxu0 0.0
          %283 = vmatpush1.msra.mxu0 %v275
          %284 = vmatprep.subr.mxu0 0.0
          %285 = vmatpush1.msra.mxu0 %v276
          %286 = vmatprep.subr.mxu0 0.0
          %287 = vmatpush1.msra.mxu0 0.0
          %288 = vmatprep.subr.mxu0 0.0
          %289 = vmatpush1.msra.mxu0 0.0
          %290 = vmatprep.subr.mxu0 0.0
          %291 = vmatpush1.msra.mxu0 0.0
          %292 = vmatprep.subr.mxu0 0.0
          %293 = vmatpush1.msra.mxu0 0.0
          %294 = vmatprep.subr.mxu0 0.0
          %295 = vmatpush1.msra.mxu0 0.0
          %296 = vmatprep.subr.mxu0 0.0
          %297 = vmatpush1.msra.mxu0 0.0
          %298 = vmatprep.subr.mxu0 0.0
          %299 = vmatpush1.msra.mxu0 0.0
          %300 = vmatprep.subr.mxu0 0.0
          %301 = vmatpush1.msra.mxu0 0.0
          %302 = vmatprep.subr.mxu0 0.0
          %303 = vmatpush1.msra.mxu0 0.0
          %304 = vmatprep.subr.mxu0 0.0
          %305 = vmatpush1.msra.mxu0 0.0
          %306 = vmatprep.subr.mxu0 0.0
          %307 = vmatpush1.msra.mxu0 0.0
          %308 = vmatprep.subr.mxu0 0.0
          %309 = vmatpush1.msra.mxu0 0.0
          %310 = vmatprep.subr.mxu0 0.0
          %311 = vmatpush1.msra.mxu0 0.0
          %312 = vmatprep.subr.mxu0 0.0
          %313 = vmatpush1.msra.mxu0 0.0
          %314 = vmatprep.subr.mxu0 0.0
          %315 = vmatpush1.msra.mxu0 0.0
          %316 = vmatprep.subr.mxu0 0.0
          %317 = vmatpush1.msra.mxu0 0.0
          %318 = vmatprep.subr.mxu0 0.0
          %319 = vmatpush1.msra.mxu0 0.0
          %320 = vmatprep.subr.mxu0 0.0
          %321 = vmatpush1.msra.mxu0 0.0
          %322 = vmatprep.subr.mxu0 0.0
          %323 = vmatpush1.msra.mxu0 0.0
          %324 = vmatprep.subr.mxu0 0.0
          %325 = vmatpush1.msra.mxu0 0.0
          %326 = vmatprep.subr.mxu0 0.0
          %327 = vmatpush1.msra.mxu0 0.0
          %328 = vmatprep.subr.mxu0 0.0
          %329 = vmatpush1.msra.mxu0 0.0
          %330 = vmatprep.subr.mxu0 0.0
          %331 = vmatpush1.msra.mxu0 0.0
          %332 = vmatprep.subr.mxu0 0.0
          %333 = vmatpush1.msra.mxu0 0.0
          %334 = vmatprep.subr.mxu0 0.0
          %335 = vmatpush1.msra.mxu0 0.0
          %336 = vmatprep.subr.mxu0 0.0
          %337 = vmatpush1.msra.mxu0 0.0
          %338 = vmatprep.subr.mxu0 0.0
          %339 = vmatpush1.msra.mxu0 0.0
          %340 = vmatprep.subr.mxu0 0.0
          %341 = vmatpush1.msra.mxu0 0.0
          %342 = vmatprep.subr.mxu0 0.0
          %343 = vmatpush1.msra.mxu0 0.0
          %344 = vmatprep.subr.mxu0 0.0
          %345 = vmatpush1.msra.mxu0 0.0
          %346 = vmatprep.mubr.f32.mxu0 0.0
          %347 = vmatmul.mubr.f32.gmra.mrb[0].mxu0 %v280
          %v348 = vpop.f32.mrb[0].mxu0
          %v349 = vadd.f32 0.0, %v348
          %v350 = vpop.f32.mrb[0].mxu0
          %351 = vdwg.mxu0
          %v352 = vmax.f32 %v349, 0.0
          %vm353 = vcmask 15360
          %v355 = vsel %vm353, %v352, 0
          %vm357 = vcmask 1041408
          %v359 = vsel %vm357, %v277, 0
          %361 = vmatprep.subr.mxu0 0.0
          %362 = vmatpush1.msra.mxu0 %v359
          %363 = vmatprep.subr.mxu0 0.0
          %364 = vmatpush1.msra.mxu0 0.0
          %365 = vmatprep.subr.mxu0 0.0
          %366 = vmatpush1.msra.mxu0 0.0
          %367 = vmatprep.subr.mxu0 0.0
          %368 = vmatpush1.msra.mxu0 0.0
          %369 = vmatprep.subr.mxu0 0.0
          %370 = vmatpush1.msra.mxu0 0.0
          %371 = vmatprep.subr.mxu0 0.0
          %372 = vmatpush1.msra.mxu0 0.0
          %373 = vmatprep.subr.mxu0 0.0
          %374 = vmatpush1.msra.mxu0 0.0
          %375 = vmatprep.subr.mxu0 0.0
          %376 = vmatpush1.msra.mxu0 0.0
          %377 = vmatprep.subr.mxu0 0.0
          %378 = vmatpush1.msra.mxu0 0.0
          %379 = vmatprep.subr.mxu0 0.0
          %380 = vmatpush1.msra.mxu0 0.0
          %381 = vmatprep.subr.mxu0 0.0
          %382 = vmatpush1.msra.mxu0 0.0
          %383 = vmatprep.subr.mxu0 0.0
          %384 = vmatpush1.msra.mxu0 0.0
          %385 = vmatprep.subr.mxu0 0.0
          %386 = vmatpush1.msra.mxu0 0.0
          %387 = vmatprep.subr.mxu0 0.0
          %388 = vmatpush1.msra.mxu0 0.0
          %389 = vmatprep.subr.mxu0 0.0
          %390 = vmatpush1.msra.mxu0 0.0
          %391 = vmatprep.subr.mxu0 0.0
          %392 = vmatpush1.msra.mxu0 0.0
          %393 = vmatprep.subr.mxu0 0.0
          %394 = vmatpush1.msra.mxu0 0.0
          %395 = vmatprep.subr.mxu0 0.0
          %396 = vmatpush1.msra.mxu0 0.0
          %397 = vmatprep.subr.mxu0 0.0
          %398 = vmatpush1.msra.mxu0 0.0
          %399 = vmatprep.subr.mxu0 0.0
          %400 = vmatpush1.msra.mxu0 0.0
          %401 = vmatprep.subr.mxu0 0.0
          %402 = vmatpush1.msra.mxu0 0.0
          %403 = vmatprep.subr.mxu0 0.0
          %404 = vmatpush1.msra.mxu0 0.0
          %405 = vmatprep.subr.mxu0 0.0
          %406 = vmatpush1.msra.mxu0 0.0
          %407 = vmatprep.subr.mxu0 0.0
          %408 = vmatpush1.msra.mxu0 0.0
          %409 = vmatprep.subr.mxu0 0.0
          %410 = vmatpush1.msra.mxu0 0.0
          %411 = vmatprep.subr.mxu0 0.0
          %412 = vmatpush1.msra.mxu0 0.0
          %413 = vmatprep.subr.mxu0 0.0
          %414 = vmatpush1.msra.mxu0 0.0
          %415 = vmatprep.subr.mxu0 0.0
          %416 = vmatpush1.msra.mxu0 0.0
          %417 = vmatprep.subr.mxu0 0.0
          %418 = vmatpush1.msra.mxu0 0.0
          %419 = vmatprep.subr.mxu0 0.0
          %420 = vmatpush1.msra.mxu0 0.0
          %421 = vmatprep.subr.mxu0 0.0
          %422 = vmatpush1.msra.mxu0 0.0
          %423 = vmatprep.subr.mxu0 0.0
          %424 = vmatpush1.msra.mxu0 0.0
          %425 = vmatprep.mubr.f32.mxu0 0.0
          %426 = vmatmul.mubr.f32.gmra.mrb[0].mxu0 %v355
          %v427 = vpop.f32.mrb[0].mxu0
          %v428 = vadd.f32 0.0, %v427
          %v429 = vpop.f32.mrb[0].mxu0
          %430 = vdwg.mxu0
          %v432 = vrot.slane %v428, 1
          %v434 = vadd.f32 %v428, %v432
          %v435 = vxor.u32 %v434, 2147483648
          %v436 = vmul.f32 %v435, 1.442695
          %v437 = vpow.pop %v436
          %v438 = vadd.f32 %v437, 1.0
          %v439 = vrcp.pop %v438
          %v440 = vmul.f32 1.0, %v439
          %441 = vst.msk [vmem:[%s203] sm:$0x1] %vm249, %v440
        $region44: #{tpu_custom_call.1} parent=31 // pred_fallthru
          _
        %s442 = sand.u32 %s110, 1
        %s443 = scalar_lea.sflag [#allocation5], %s442
        %s444 = sand.u32 %s110, 1
        %s445 = scalar_lea.vmem [#allocation6], %s444
        // Predicated region
        $region45: #{tpu_custom_call.1} parent=31 // pred_check
          %p446 = pneg %p120
        $region46: #{tpu_custom_call.1} parent=31 // pred_check_branch
          %448 = sbr.rel (%p446) target = $region48
        $region47: #{tpu_custom_call.1} parent=31 // pred_region
          %s450 = ssub.s32 16, 16
          %451 = vsyncadd %s443, %s450
          %s452 = smul.addr %s24, 16
          %s453 = scalar_lea.hbm %s3, %s452
          %s455 = sshll.u32 %s445, 4
          %s456 = int_to_ptr.vmem [resolvable:$true] %s455
          %458 = dma.vmem_to_hbm [thread:$0]  %s456, 16, %s453, %s443
        $region48: #{tpu_custom_call.1} parent=31 // pred_fallthru
          _
      $region32: #{tpu_custom_call.1} parent=5 // pred_fallthru
        _
      %p459 = scmp.le.s32.totalorder 2, %s15
      // Predicated region
      $region49: #{tpu_custom_call.1} parent=5 // pred_check
        %p460 = pneg %p459
      $region50: #{tpu_custom_call.1} parent=5 // pred_check_branch
        %462 = sbr.rel (%p460) target = $region52
      $region51: #{tpu_custom_call.1} parent=5 // pred_region
        %s463 = ssub.s32 %s15, 2
        // Predicated region
        $region53: #{tpu_custom_call.1} parent=51 // pred_check
          %p464 = pneg %p126
        $region54: #{tpu_custom_call.1} parent=51 // pred_check_branch
          %466 = sbr.rel (%p464) target = $region56
        $region55: #{tpu_custom_call.1} parent=51 // pred_region
          %s467 = sand.u32 %s111, 1
          %s468 = scalar_lea.sflag [#allocation5], %s467
          %s469 = sand.u32 %s111, 1
          %s470 = scalar_lea.vmem [#allocation6], %s469
          %471 = dma.done %s468, 16
        $region56: #{tpu_custom_call.1} parent=51 // pred_fallthru
          _
      $region52: #{tpu_custom_call.1} parent=5 // pred_fallthru
        _
    $region6: #{tpu_custom_call.1} parent=1 // loop_footer
      %s19 = sadd.s32 1, %s15
    $region7: #{tpu_custom_call.1} parent=1 // loop_footer_branch
      %14 = sbr.rel target = $region3
    $region8: #{tpu_custom_call.1} parent=1 // loop_exit
      _
    %472 = vsyncpa [#allocation4], 1
    %s473 = scalar_lea.sflag [#allocation4], 1
    %474 = vsyncpa %s473, 1
    %475 = vsyncpa [#allocation5], 1
    %s476 = scalar_lea.sflag [#allocation5], 1
    %477 = vsyncpa %s476, 1

</llo_original>
